<compile_context>
chip_gen: v5e
topology: v5e:2x2
jax: 0.10.0
libtpu: 0.0.40
codegen_flags: <defaults>
</compile_context>

<pallas_src>
import functools

import jax
import jax.numpy as jnp
from jax.experimental import pallas as pl
from jax.experimental.pallas import tpu as pltpu


def _round_up(x, m):
    return ((x + m - 1) // m) * m


def _vmem_capacity_bytes():
    try:
        return int(pltpu.get_tpu_info().vmem_capacity_bytes)
    except Exception:
        return 128 << 20


def _default_tile_m():
    # Per-generation compute/DMA crossover (perf review):
    #   v5e ~256-384, v6e ~768-1024, v7x ~384-512 (64 MiB VMEM, 2 TCs).
    try:
        kind = jax.devices()[0].device_kind.lower()
    except Exception:
        kind = ""
    if "v5" in kind:
        return 256
    if "v6" in kind:
        return 768
    if _vmem_capacity_bytes() <= (64 << 20):   # v7x-class VMEM
        return 512
    return 512


# ----------------------------------------------------------------------------
# Primary path: single weight sweep, output block resident over the V sweep.
# Grid = (S tiles [parallel], V tiles [arbitrary, innermost]).
# ----------------------------------------------------------------------------
def _single_pass_kernel(x_ref, w_ref, b_ref, o_ref, m_sc, l_sc, *, tv):
    # x_ref: (tm, E)  w_ref: (E, tv)  b_ref: (1, tv)  o_ref: (tm, V_pad)
    # m_sc / l_sc: (tm, 1) f32 running max / rescaled exp-sum.
    j = pl.program_id(1)

    @pl.when(j == 0)
    def _init():
        m_sc[...] = jnp.full(m_sc.shape, -jnp.inf, dtype=m_sc.dtype)
        l_sc[...] = jnp.zeros(l_sc.shape, dtype=l_sc.dtype)

    # MXU matmul: inputs already cast in the wrapper; f32 accumulation.
    logits = jnp.dot(x_ref[...], w_ref[...],
                     preferred_element_type=jnp.float32)
    logits = logits + b_ref[...].astype(jnp.float32)

    # Online softmax statistics.
    m_prev = m_sc[...]
    m_new = jnp.maximum(m_prev, jnp.max(logits, axis=-1, keepdims=True))
    l_sc[...] = (l_sc[...] * jnp.exp(m_prev - m_new)
                 + jnp.sum(jnp.exp(logits - m_new), axis=-1, keepdims=True))
    m_sc[...] = m_new

    # Stash the raw logits tile into the resident output block.
    col = pl.multiple_of(j * tv, 128)
    o_ref[:, pl.ds(col, tv)] = logits.astype(o_ref.dtype)

    @pl.when(j == pl.num_programs(1) - 1)
    def _finalize():
        lse = m_sc[...] + jnp.log(l_sc[...])
        o_ref[...] = (o_ref[...].astype(jnp.float32) - lse).astype(o_ref.dtype)


# ----------------------------------------------------------------------------
# Large-vocab fallback: two sweeps, W streamed only 2x TOTAL (S axis innermost
# keeps the weight tile VMEM-resident across all S tiles).
# Grid = (pass, V tiles, S tiles [innermost]).
# ----------------------------------------------------------------------------
def _two_sweep_kernel(x_ref, w_ref, b_ref, o_ref, m_sc, l_sc, lse_sc):
    # m_sc / l_sc / lse_sc: (n_s, tm, 1) f32, one slice per S tile.
    p = pl.program_id(0)   # 0 = reduction sweep, 1 = write sweep
    j = pl.program_id(1)   # vocab-tile index
    i = pl.program_id(2)   # S-tile index (innermost -> W tile stays resident)

    @pl.when(jnp.logical_and(p == 0, j == 0))
    def _init():
        m_sc[i] = jnp.full(m_sc.shape[1:], -jnp.inf, dtype=m_sc.dtype)
        l_sc[i] = jnp.zeros(l_sc.shape[1:], dtype=l_sc.dtype)

    logits = jnp.dot(x_ref[...], w_ref[...],
                     preferred_element_type=jnp.float32)
    logits = logits + b_ref[...].astype(jnp.float32)

    @pl.when(p == 0)
    def _reduce():
        m_prev = m_sc[i]
        m_new = jnp.maximum(m_prev, jnp.max(logits, axis=-1, keepdims=True))
        l_sc[i] = (l_sc[i] * jnp.exp(m_prev - m_new)
                   + jnp.sum(jnp.exp(logits - m_new), axis=-1, keepdims=True))
        m_sc[i] = m_new

    @pl.when(p == 1)
    def _write():
        @pl.when(j == 0)
        def _lse_once():      # one EUP log per S tile, reused for all V tiles
            lse_sc[i] = m_sc[i] + jnp.log(l_sc[i])
        o_ref[...] = (logits - lse_sc[i]).astype(o_ref.dtype)


@functools.partial(jax.jit, static_argnames=("tile_m", "tile_v", "matmul_dtype",
                                             "out_dtype", "two_sweep"))
def decoder_head(x, w, b, *, tile_m=None, tile_v=None,
                 matmul_dtype=jnp.bfloat16, out_dtype=None, two_sweep=None):
    """DecoderHead forward: log_softmax(x @ w + b, axis=-1).

    x: (S, E), w: (E, V) (transpose of torch.nn.Linear.weight), b: (V,).
    Returns (S, V) log-probs in out_dtype (default: x.dtype; pass bf16 to
    halve the output HBM writeback if downstream tolerates it).
    """
    S, E = x.shape
    E2, V = w.shape
    assert E2 == E and b.shape == (V,)
    out_dtype = jnp.dtype(out_dtype if out_dtype is not None else x.dtype)
    mm_dtype = jnp.dtype(matmul_dtype)

    vmem_cap = _vmem_capacity_bytes()
    if tile_m is None:
        tile_m = _default_tile_m()
    if tile_v is None:
        tile_v = 2048 if vmem_cap > (96 << 20) else 1024

    tm = _round_up(min(tile_m, S), 8)                       # MXU row tile
    tv = _round_up(min(tile_v, _round_up(V, 128)), 128)     # lane-dense V tile
    v_pad = _round_up(V, tv)

    # Pre-cast ONCE in the wrapper (not per grid step in the kernel).
    xc = x.astype(mm_dtype)
    wc = w.astype(mm_dtype)
    bc = b.astype(jnp.float32)
    if v_pad != V:
        # Pad V in the wrapper: zero weight columns, very negative bias, so no
        # in-kernel masking is needed and padded columns never affect m/l.
        wc = jnp.pad(wc, ((0, 0), (0, v_pad - V)))
        bc = jnp.pad(bc, (0, v_pad - V), constant_values=-1e30)
    bc = bc.reshape(1, v_pad)

    n_s = pl.cdiv(S, tm)
    n_v = v_pad // tv
    mm_b = mm_dtype.itemsize
    out_b = out_dtype.itemsize

    # Generation-aware VMEM cap: 75% of physical, leaving compiler headroom.
    budget = int(vmem_cap * 0.75)

    # Single-pass working set (double-buffered streamed blocks + resident
    # (tm, v_pad) output block + lane-padded softmax stats).
    sp_working = (2 * tm * E * mm_b            # x block
                  + 2 * E * tv * mm_b          # streamed weight tile
                  + 2 * 8 * tv * 4             # bias tile (sublane padded)
                  + 2 * tm * v_pad * out_b     # resident output block
                  + 2 * tm * 512)              # m / l scratch
    if two_sweep is None:
        two_sweep = sp_working > (budget - (4 << 20))

    if not two_sweep:
        vmem_limit = int(min(max(sp_working + (4 << 20), 32 << 20), budget))
        kernel = functools.partial(_single_pass_kernel, tv=tv)
        out = pl.pallas_call(
            kernel,
            out_shape=jax.ShapeDtypeStruct((S, v_pad), out_dtype),
            grid_spec=pltpu.PrefetchScalarGridSpec(
                num_scalar_prefetch=0,
                grid=(n_s, n_v),
                in_specs=[
                    pl.BlockSpec((tm, E), lambda i, j: (i, 0)),
                    pl.BlockSpec((E, tv), lambda i, j: (0, j)),
                    pl.BlockSpec((1, tv), lambda i, j: (0, j)),
                ],
                # Output block index constant across the V sweep -> stays
                # resident in VMEM; written back only when the S tile changes.
                out_specs=pl.BlockSpec((tm, v_pad), lambda i, j: (i, 0)),
                scratch_shapes=[
                    pltpu.VMEM((tm, 1), jnp.float32),   # running max
                    pltpu.VMEM((tm, 1), jnp.float32),   # running exp-sum
                ],
            ),
            compiler_params=pltpu.CompilerParams(
                dimension_semantics=("parallel", "arbitrary"),
                vmem_limit_bytes=vmem_limit,
            ),
        )(xc, wc, bc)
    else:
        ts_working = (2 * tm * E * mm_b
                      + 2 * E * tv * mm_b
                      + 2 * 8 * tv * 4
                      + 2 * tm * tv * out_b
                      + 3 * n_s * tm * 512)
        vmem_limit = int(min(max(ts_working + (4 << 20), 32 << 20), budget))
        out = pl.pallas_call(
            _two_sweep_kernel,
            out_shape=jax.ShapeDtypeStruct((S, v_pad), out_dtype),
            grid_spec=pltpu.PrefetchScalarGridSpec(
                num_scalar_prefetch=0,
                grid=(2, n_v, n_s),
                in_specs=[
                    pl.BlockSpec((tm, E), lambda p, j, i: (i, 0)),
                    pl.BlockSpec((E, tv), lambda p, j, i: (0, j)),
                    pl.BlockSpec((1, tv), lambda p, j, i: (0, j)),
                ],
                # Park on block (0, 0) during the reduction sweep (p == 0); it
                # is the first block written in pass 1, so no uninitialized
                # block is ever flushed to HBM.
                out_specs=pl.BlockSpec((tm, tv),
                                       lambda p, j, i: (i * p, j * p)),
                scratch_shapes=[
                    pltpu.VMEM((n_s, tm, 1), jnp.float32),   # running max
                    pltpu.VMEM((n_s, tm, 1), jnp.float32),   # running exp-sum
                    pltpu.VMEM((n_s, tm, 1), jnp.float32),   # lse (pass 1)
                ],
            ),
            compiler_params=pltpu.CompilerParams(
                dimension_semantics=("arbitrary", "arbitrary", "arbitrary"),
                vmem_limit_bytes=vmem_limit,
            ),
        )(xc, wc, bc)

    if v_pad != V:
        out = out[:, :V]
    return out


def reference(x, w, b, matmul_dtype=jnp.float32):
    logits = jnp.dot(x.astype(matmul_dtype), w.astype(matmul_dtype),
                     preferred_element_type=jnp.float32) + b
    return jax.nn.log_softmax(logits, axis=1)


if __name__ == "__main__":
    key = jax.random.PRNGKey(0)
    seq_length = 16
    embedding_size = 128
    vocab_size = 512

    kx, kw, kb = jax.random.split(key, 3)
    # Deterministic "PyTorch-like" uniform init for the Linear layer.
    bound = 1.0 / (embedding_size ** 0.5)
    w = jax.random.uniform(kw, (embedding_size, vocab_size),
                           jnp.float32, -bound, bound)
    b = jax.random.uniform(kb, (vocab_size,), jnp.float32, -bound, bound)
    x = jax.random.normal(kx, (seq_length, embedding_size), jnp.float32)

    ref_bf16 = reference(x, w, b, matmul_dtype=jnp.bfloat16)
    ref_f32 = reference(x, w, b, matmul_dtype=jnp.float32)

    # 1) Default (single-pass) path, bf16 MXU inputs, f32 accumulation.
    out = jax.block_until_ready(decoder_head(x, w, b))
    assert out.shape == (seq_length, vocab_size)
    err = jnp.max(jnp.abs(out - ref_bf16))
    assert jnp.allclose(out, ref_bf16, atol=2e-3, rtol=2e-3), f"max err {err}"
    assert jnp.allclose(jnp.sum(jnp.exp(out), axis=1), 1.0, atol=1e-3)

    # 2) Single-pass with small tiles + uneven V tiling (exercises the
    #    wrapper-side V padding and the online multi-tile reduction).
    out2 = jax.block_until_ready(
        decoder_head(x, w, b, tile_m=8, tile_v=384,
                     matmul_dtype=jnp.bfloat16))
    err2 = jnp.max(jnp.abs(out2 - ref_bf16))
    assert jnp.allclose(out2, ref_bf16, atol=2e-3, rtol=2e-3), f"max err {err2}"
    assert jnp.allclose(jnp.sum(jnp.exp(out2), axis=1), 1.0, atol=1e-3)

    # 3) Forced large-vocab fallback (two-sweep, W-resident-over-S grid), f32.
    out3 = jax.block_until_ready(
        decoder_head(x, w, b, tile_m=8, tile_v=128,
                     matmul_dtype=jnp.float32, two_sweep=True))
    err3 = jnp.max(jnp.abs(out3 - ref_f32))
    assert jnp.allclose(out3, ref_f32, atol=5e-3, rtol=5e-3), f"max err {err3}"
    assert jnp.allclose(jnp.sum(jnp.exp(out3), axis=1), 1.0, atol=1e-3)

    print("KERNEL_OK")
</pallas_src>

<mosaic_0001>
module attributes {stable_mosaic.version = 11 : i64} {
  func.func @_single_pass_kernel(%arg0: i32, %arg1: i32, %arg2: memref<16x128xbf16, #tpu.memory_space<vmem>>, %arg3: memref<128x512xbf16, #tpu.memory_space<vmem>>, %arg4: memref<1x512xf32, #tpu.memory_space<vmem>>, %arg5: memref<16x512xf32, #tpu.memory_space<vmem>>, %arg6: memref<16x1xf32, #tpu.memory_space<vmem>>, %arg7: memref<16x1xf32, #tpu.memory_space<vmem>>) attributes {dimension_semantics = [#tpu.dimension_semantics<parallel>, #tpu.dimension_semantics<arbitrary>], iteration_bounds = array<i64: 1, 1>, scalar_prefetch = 0 : i64, scratch_operands = 2 : i64, tpu.core_type = #tpu.core_type<tc>, window_params = [{transform_indices = @transform_0, window_bounds = array<i64: 16, 128>}, {transform_indices = @transform_1, window_bounds = array<i64: 128, 512>}, {transform_indices = @transform_2, window_bounds = array<i64: 1, 512>}, {transform_indices = @transform_3, window_bounds = array<i64: 16, 512>}]} {
    %c0_i32 = arith.constant 0 : i32
    %0 = arith.cmpi eq, %arg1, %c0_i32 : i32
    %1 = arith.extui %0 : i1 to i32
    %c0_i32_0 = arith.constant 0 : i32
    %2 = arith.cmpi ne, %1, %c0_i32_0 : i32
    scf.if %2 {
      %cst_19 = arith.constant 0xFF800000 : f32
      %32 = vector.broadcast %cst_19 : f32 to vector<16x1xf32>
      %c0_20 = arith.constant 0 : index
      %c0_21 = arith.constant 0 : index
      %33 = vector.load %arg6[%c0_20, %c0_21] : memref<16x1xf32, #tpu.memory_space<vmem>>, vector<16x1xf32>
      tpu.vector_store %arg6[%c0_20, %c0_21], %32 {strides = array<i32>} : memref<16x1xf32, #tpu.memory_space<vmem>>, vector<16x1xf32>,
      %cst_22 = arith.constant 0.000000e+00 : f32
      %34 = vector.broadcast %cst_22 : f32 to vector<16x1xf32>
      %c0_23 = arith.constant 0 : index
      %c0_24 = arith.constant 0 : index
      %35 = vector.load %arg7[%c0_23, %c0_24] : memref<16x1xf32, #tpu.memory_space<vmem>>, vector<16x1xf32>
      tpu.vector_store %arg7[%c0_23, %c0_24], %34 {strides = array<i32>} : memref<16x1xf32, #tpu.memory_space<vmem>>, vector<16x1xf32>,
    } else {
    }
    %c0 = arith.constant 0 : index
    %c0_1 = arith.constant 0 : index
    %3 = vector.load %arg2[%c0, %c0_1] : memref<16x128xbf16, #tpu.memory_space<vmem>>, vector<16x128xbf16>
    %c0_2 = arith.constant 0 : index
    %c0_3 = arith.constant 0 : index
    %4 = vector.load %arg3[%c0_2, %c0_3] : memref<128x512xbf16, #tpu.memory_space<vmem>>, vector<128x512xbf16>
    %cst = arith.constant dense<0.000000e+00> : vector<16x512xf32>
    %5 = tpu.matmul %3, %4, %cst {dimension_numbers = #tpu.dot_dimension_numbers<[1], [0], [0], [1], [0, 0, 1, 1], [], []>} : vector<16x128xbf16>, vector<128x512xbf16>, vector<16x512xf32> -> vector<16x512xf32>
    %c0_4 = arith.constant 0 : index
    %c0_5 = arith.constant 0 : index
    %6 = vector.load %arg4[%c0_4, %c0_5] : memref<1x512xf32, #tpu.memory_space<vmem>>, vector<1x512xf32>
    %7 = vector.broadcast %6 : vector<1x512xf32> to vector<16x512xf32>
    %8 = arith.addf %5, %7 : vector<16x512xf32>
    %c0_6 = arith.constant 0 : index
    %c0_7 = arith.constant 0 : index
    %9 = vector.load %arg6[%c0_6, %c0_7] : memref<16x1xf32, #tpu.memory_space<vmem>>, vector<16x1xf32>
    %cst_8 = arith.constant dense<0xFF800000> : vector<16xf32>
    %10 = vector.multi_reduction <maximumf>, %8, %cst_8 [1] : vector<16x512xf32> to vector<16xf32>
    %11 = vector.shape_cast %10 : vector<16xf32> to vector<16x1xf32>
    %12 = arith.maximumf %9, %11 : vector<16x1xf32>
    %c0_9 = arith.constant 0 : index
    %c0_10 = arith.constant 0 : index
    %13 = vector.load %arg7[%c0_9, %c0_10] : memref<16x1xf32, #tpu.memory_space<vmem>>, vector<16x1xf32>
    %14 = arith.subf %9, %12 : vector<16x1xf32>
    %15 = math.exp %14 : vector<16x1xf32>
    %16 = arith.mulf %13, %15 : vector<16x1xf32>
    %17 = vector.broadcast %12 : vector<16x1xf32> to vector<16x512xf32>
    %18 = arith.subf %8, %17 : vector<16x512xf32>
    %19 = math.exp %18 : vector<16x512xf32>
    %cst_11 = arith.constant dense<0.000000e+00> : vector<16xf32>
    %20 = vector.multi_reduction <add>, %19, %cst_11 [1] : vector<16x512xf32> to vector<16xf32>
    %21 = vector.shape_cast %20 : vector<16xf32> to vector<16x1xf32>
    %22 = arith.addf %16, %21 : vector<16x1xf32>
    %c0_12 = arith.constant 0 : index
    %c0_13 = arith.constant 0 : index
    %23 = vector.load %arg7[%c0_12, %c0_13] : memref<16x1xf32, #tpu.memory_space<vmem>>, vector<16x1xf32>
    tpu.vector_store %arg7[%c0_12, %c0_13], %22 {strides = array<i32>} : memref<16x1xf32, #tpu.memory_space<vmem>>, vector<16x1xf32>,
    %c0_14 = arith.constant 0 : index
    %c0_15 = arith.constant 0 : index
    %24 = vector.load %arg6[%c0_14, %c0_15] : memref<16x1xf32, #tpu.memory_space<vmem>>, vector<16x1xf32>
    tpu.vector_store %arg6[%c0_14, %c0_15], %12 {strides = array<i32>} : memref<16x1xf32, #tpu.memory_space<vmem>>, vector<16x1xf32>,
    %c512_i32 = arith.constant 512 : i32
    %25 = arith.muli %arg1, %c512_i32 : i32
    %26 = tpu.assume_multiple %25, 128 : i32
    %c0_16 = arith.constant 0 : index
    %27 = arith.index_cast %26 : i32 to index
    %28 = vector.load %arg5[%c0_16, %27] : memref<16x512xf32, #tpu.memory_space<vmem>>, vector<16x512xf32>
    tpu.vector_store %arg5[%c0_16, %27], %8 {strides = array<i32>} : memref<16x512xf32, #tpu.memory_space<vmem>>, vector<16x512xf32>,
    %c0_i32_17 = arith.constant 0 : i32
    %29 = arith.cmpi eq, %arg1, %c0_i32_17 : i32
    %30 = arith.extui %29 : i1 to i32
    %c0_i32_18 = arith.constant 0 : i32
    %31 = arith.cmpi ne, %30, %c0_i32_18 : i32
    scf.if %31 {
      %c0_19 = arith.constant 0 : index
      %c0_20 = arith.constant 0 : index
      %32 = vector.load %arg6[%c0_19, %c0_20] : memref<16x1xf32, #tpu.memory_space<vmem>>, vector<16x1xf32>
      %c0_21 = arith.constant 0 : index
      %c0_22 = arith.constant 0 : index
      %33 = vector.load %arg7[%c0_21, %c0_22] : memref<16x1xf32, #tpu.memory_space<vmem>>, vector<16x1xf32>
      %34 = math.log %33 : vector<16x1xf32>
      %35 = arith.addf %32, %34 : vector<16x1xf32>
      %c0_23 = arith.constant 0 : index
      %c0_24 = arith.constant 0 : index
      %36 = vector.load %arg5[%c0_23, %c0_24] : memref<16x512xf32, #tpu.memory_space<vmem>>, vector<16x512xf32>
      %37 = vector.broadcast %35 : vector<16x1xf32> to vector<16x512xf32>
      %38 = arith.subf %36, %37 : vector<16x512xf32>
      %c0_25 = arith.constant 0 : index
      %c0_26 = arith.constant 0 : index
      %39 = vector.load %arg5[%c0_25, %c0_26] : memref<16x512xf32, #tpu.memory_space<vmem>>, vector<16x512xf32>
      tpu.vector_store %arg5[%c0_25, %c0_26], %38 {strides = array<i32>} : memref<16x512xf32, #tpu.memory_space<vmem>>, vector<16x512xf32>,
    } else {
    }
    return
  }
  func.func @transform_0(%arg0: i32, %arg1: i32) -> (i32, i32) {
    %c0_i32 = arith.constant 0 : i32
    %c0_i32_0 = arith.constant 0 : i32
    return %arg0, %c0_i32 : i32, i32
  }
  func.func @transform_1(%arg0: i32, %arg1: i32) -> (i32, i32) {
    %c0_i32 = arith.constant 0 : i32
    %c0_i32_0 = arith.constant 0 : i32
    return %c0_i32, %arg1 : i32, i32
  }
  func.func @transform_2(%arg0: i32, %arg1: i32) -> (i32, i32) {
    %c0_i32 = arith.constant 0 : i32
    %c0_i32_0 = arith.constant 0 : i32
    return %c0_i32, %arg1 : i32, i32
  }
  func.func @transform_3(%arg0: i32, %arg1: i32) -> (i32, i32) {
    %c0_i32 = arith.constant 0 : i32
    %c0_i32_0 = arith.constant 0 : i32
    return %arg0, %c0_i32 : i32, i32
  }
}

</mosaic_0001>

<llo_original>
// kernel: decoder_head.1
$region0: #{decoder_head.1}
  #allocation0 [shape = 'u32[]', space=smem, size = 0x4, offset = 0x4, fixed_abs, tag = 'smem constant byte address 0x4 - core index']
  #allocation1 [shape = 'u32[72,128]{1,0:T(1,128)}', space=vmem, size = 0x9000, scoped, tag = 'internal scratch']
  #allocation2 [shape = 'f32[16,1]{1,0:T(8,128)}', space=vmem, size = 0x2000, scoped, tag = 'scratch operand']
  #allocation3 [shape = 'f32[16,1]{1,0:T(8,128)}', space=vmem, size = 0x2000, scoped, tag = 'scratch operand']
  %s0 = inlined_call_operand.vmem [shape: bf16[16,128], index: 0, kind: input, shape index: {}]
  %s1 = inlined_call_operand.vmem [shape: bf16[128,512], index: 1, kind: input, shape index: {}]
  %s2 = inlined_call_operand.vmem [shape: f32[1,512], index: 2, kind: input, shape index: {}]
  %s3 = inlined_call_operand.hbm [shape: f32[16,512], index: 3, kind: output, shape index: {}]
  %s4 = sld [smem:[#allocation0]]
  $region30: #{decoder_head.1} parent=0
    _
  %s6 = ssub.s32 1, %s4
  %s7 = scalar_select 0, %s6, %s4
  $region1: #{decoder_head.1} parent=0
    #allocation4 [shape = 'u8[32768]{0}', space=vmem, size = 0x8000, scoped, tag = 'output window, operand 0, single buffered']
    #allocation5 [shape = 's32[1]{0}', space=sflag, size = 0x4, scoped, tag = 'scoped memory for decoder_head.1']
    %8 = vsyncpa [#allocation5], 0
    // Predicated region
    $region2: #{decoder_head.1} parent=1 // pred_check
      _
    $region3: #{decoder_head.1} parent=1 // pred_check_branch
      %10 = sbr.rel (0) target = $region5
    $region4: #{decoder_head.1} parent=1 // pred_region
      _
    $region5: #{decoder_head.1} parent=1 // pred_fallthru
      _
    // Predicated region
    $region6: #{decoder_head.1} parent=1 // pred_check
      _
    $region7: #{decoder_head.1} parent=1 // pred_check_branch
      %12 = sbr.rel (0) target = $region9
    $region8: #{decoder_head.1} parent=1 // pred_region
      _
    $region9: #{decoder_head.1} parent=1 // pred_fallthru
      _
    // Predicated region
    $region10: #{decoder_head.1} parent=1 // pred_check
      _
    $region11: #{decoder_head.1} parent=1 // pred_check_branch
      %14 = sbr.rel (0) target = $region13
    $region12: #{decoder_head.1} parent=1 // pred_region
      _
    $region13: #{decoder_head.1} parent=1 // pred_fallthru
      _
    %p15 = scmp.eq.s32.totalorder 0, 0
    // Predicated region
    $region14: #{decoder_head.1} parent=1 // pred_check
      %p16 = pneg %p15
    $region15: #{decoder_head.1} parent=1 // pred_check_branch
      %18 = sbr.rel (%p16) target = $region17
    $region16: #{decoder_head.1} parent=1 // pred_region
      %vm19 = vcmask 7168
      %20 = vst.msk [vmem:[#allocation2] sm:$0xff] %vm19, -inf
      %21 = vst.msk [vmem:[#allocation2 + $0x8] sm:$0xff] %vm19, -inf
      %22 = vst.msk [vmem:[#allocation3] sm:$0xff] %vm19, 0.0
      %23 = vst.msk [vmem:[#allocation3 + $0x8] sm:$0xff] %vm19, 0.0
    $region17: #{decoder_head.1} parent=1 // pred_fallthru
      _
    %v24 = vld [vmem:[%s0] sm:$0xf]
    %v25 = vld [vmem:[%s0 + $0x4] sm:$0xf]
    %v26 = vld [vmem:[%s1] sm:$0xff]
    %v27 = vld [vmem:[%s1 + $0x8] sm:$0xff]
    %v28 = vld [vmem:[%s1 + $0x10] sm:$0xff]
    %v29 = vld [vmem:[%s1 + $0x18] sm:$0xff]
    %v30 = vld [vmem:[%s1 + $0x20] sm:$0xff]
    %v31 = vld [vmem:[%s1 + $0x28] sm:$0xff]
    %v32 = vld [vmem:[%s1 + $0x30] sm:$0xff]
    %v33 = vld [vmem:[%s1 + $0x38] sm:$0xff]
    %v34 = vld [vmem:[%s1 + $0x40] sm:$0xff]
    %v35 = vld [vmem:[%s1 + $0x48] sm:$0xff]
    %v36 = vld [vmem:[%s1 + $0x50] sm:$0xff]
    %v37 = vld [vmem:[%s1 + $0x58] sm:$0xff]
    %v38 = vld [vmem:[%s1 + $0x60] sm:$0xff]
    %v39 = vld [vmem:[%s1 + $0x68] sm:$0xff]
    %v40 = vld [vmem:[%s1 + $0x70] sm:$0xff]
    %v41 = vld [vmem:[%s1 + $0x78] sm:$0xff]
    %v42 = vld [vmem:[%s1 + $0x80] sm:$0xff]
    %v43 = vld [vmem:[%s1 + $0x88] sm:$0xff]
    %v44 = vld [vmem:[%s1 + $0x90] sm:$0xff]
    %v45 = vld [vmem:[%s1 + $0x98] sm:$0xff]
    %v46 = vld [vmem:[%s1 + $0xa0] sm:$0xff]
    %v47 = vld [vmem:[%s1 + $0xa8] sm:$0xff]
    %v48 = vld [vmem:[%s1 + $0xb0] sm:$0xff]
    %v49 = vld [vmem:[%s1 + $0xb8] sm:$0xff]
    %v50 = vld [vmem:[%s1 + $0xc0] sm:$0xff]
    %v51 = vld [vmem:[%s1 + $0xc8] sm:$0xff]
    %v52 = vld [vmem:[%s1 + $0xd0] sm:$0xff]
    %v53 = vld [vmem:[%s1 + $0xd8] sm:$0xff]
    %v54 = vld [vmem:[%s1 + $0xe0] sm:$0xff]
    %v55 = vld [vmem:[%s1 + $0xe8] sm:$0xff]
    %v56 = vld [vmem:[%s1 + $0xf0] sm:$0xff]
    %v57 = vld [vmem:[%s1 + $0xf8] sm:$0xff]
    %v58 = vld [vmem:[%s2] sm:$0xf]
    %v60 = vperm.slane %v58, 0
    %v61 = vperm.slane %v58, 1
    %v62 = vperm.slane %v58, 2
    %v63 = vperm.slane %v58, 3
    %v70 = vunpack.c.l.b16 %v24
    %v71 = vunpack.c.l.b16 %v25
    %v72 = vpack.c.b16 %v71, %v70
    %v106 = vunpack.c.l.b16 %v26
    %v107 = vunpack.c.h.b16 %v26
    %v108 = vunpack.c.l.b16 %v27
    %v109 = vunpack.c.h.b16 %v27
    %v110 = vunpack.c.l.b16 %v28
    %v111 = vunpack.c.h.b16 %v28
    %v112 = vunpack.c.l.b16 %v29
    %v113 = vunpack.c.h.b16 %v29
    %v114 = vunpack.c.l.b16 %v30
    %v115 = vunpack.c.h.b16 %v30
    %v116 = vunpack.c.l.b16 %v31
    %v117 = vunpack.c.h.b16 %v31
    %v118 = vunpack.c.l.b16 %v32
    %v119 = vunpack.c.h.b16 %v32
    %v120 = vunpack.c.l.b16 %v33
    %v121 = vunpack.c.h.b16 %v33
    %v122 = vunpack.c.l.b16 %v34
    %v123 = vunpack.c.h.b16 %v34
    %v124 = vunpack.c.l.b16 %v35
    %v125 = vunpack.c.h.b16 %v35
    %v126 = vunpack.c.l.b16 %v36
    %v127 = vunpack.c.h.b16 %v36
    %v128 = vunpack.c.l.b16 %v37
    %v129 = vunpack.c.h.b16 %v37
    %v130 = vunpack.c.l.b16 %v38
    %v131 = vunpack.c.h.b16 %v38
    %v132 = vunpack.c.l.b16 %v39
    %v133 = vunpack.c.h.b16 %v39
    %v134 = vunpack.c.l.b16 %v40
    %v135 = vunpack.c.h.b16 %v40
    %v136 = vunpack.c.l.b16 %v41
    %v137 = vunpack.c.h.b16 %v41
    %v138 = vunpack.c.l.b16 %v42
    %v139 = vunpack.c.h.b16 %v42
    %v140 = vunpack.c.l.b16 %v43
    %v141 = vunpack.c.h.b16 %v43
    %v142 = vunpack.c.l.b16 %v44
    %v143 = vunpack.c.h.b16 %v44
    %v144 = vunpack.c.l.b16 %v45
    %v145 = vunpack.c.h.b16 %v45
    %v146 = vunpack.c.l.b16 %v46
    %v147 = vunpack.c.h.b16 %v46
    %v148 = vunpack.c.l.b16 %v47
    %v149 = vunpack.c.h.b16 %v47
    %v150 = vunpack.c.l.b16 %v48
    %v151 = vunpack.c.h.b16 %v48
    %v152 = vunpack.c.l.b16 %v49
    %v153 = vunpack.c.h.b16 %v49
    %v154 = vunpack.c.l.b16 %v50
    %v155 = vunpack.c.h.b16 %v50
    %v156 = vunpack.c.l.b16 %v51
    %v157 = vunpack.c.h.b16 %v51
    %v158 = vunpack.c.l.b16 %v52
    %v159 = vunpack.c.h.b16 %v52
    %v160 = vunpack.c.l.b16 %v53
    %v161 = vunpack.c.h.b16 %v53
    %v162 = vunpack.c.l.b16 %v54
    %v163 = vunpack.c.h.b16 %v54
    %v164 = vunpack.c.l.b16 %v55
    %v165 = vunpack.c.h.b16 %v55
    %v166 = vunpack.c.l.b16 %v56
    %v167 = vunpack.c.h.b16 %v56
    %v168 = vunpack.c.l.b16 %v57
    %v169 = vunpack.c.h.b16 %v57
    %v170 = vpack.c.b16 %v110, %v106
    %v171 = vpack.c.b16 %v111, %v107
    %v172 = vpack.c.b16 %v112, %v108
    %v173 = vpack.c.b16 %v113, %v109
    %v174 = vpack.c.b16 %v118, %v114
    %v175 = vpack.c.b16 %v119, %v115
    %v176 = vpack.c.b16 %v120, %v116
    %v177 = vpack.c.b16 %v121, %v117
    %v178 = vpack.c.b16 %v126, %v122
    %v179 = vpack.c.b16 %v127, %v123
    %v180 = vpack.c.b16 %v128, %v124
    %v181 = vpack.c.b16 %v129, %v125
    %v182 = vpack.c.b16 %v134, %v130
    %v183 = vpack.c.b16 %v135, %v131
    %v184 = vpack.c.b16 %v136, %v132
    %v185 = vpack.c.b16 %v137, %v133
    %v186 = vpack.c.b16 %v142, %v138
    %v187 = vpack.c.b16 %v143, %v139
    %v188 = vpack.c.b16 %v144, %v140
    %v189 = vpack.c.b16 %v145, %v141
    %v190 = vpack.c.b16 %v150, %v146
    %v191 = vpack.c.b16 %v151, %v147
    %v192 = vpack.c.b16 %v152, %v148
    %v193 = vpack.c.b16 %v153, %v149
    %v194 = vpack.c.b16 %v158, %v154
    %v195 = vpack.c.b16 %v159, %v155
    %v196 = vpack.c.b16 %v160, %v156
    %v197 = vpack.c.b16 %v161, %v157
    %v198 = vpack.c.b16 %v166, %v162
    %v199 = vpack.c.b16 %v167, %v163
    %v200 = vpack.c.b16 %v168, %v164
    %v201 = vpack.c.b16 %v169, %v165
    %234 = vmatpush.bf16.msra.mxu0 %v198
    %235 = vmatpush.bf16.msra.mxu0 %v194
    %236 = vmatpush.bf16.msra.mxu0 %v190
    %237 = vmatpush.bf16.msra.mxu0 %v186
    %238 = vmatpush.bf16.msra.mxu0 %v182
    %239 = vmatpush.bf16.msra.mxu0 %v178
    %240 = vmatpush.bf16.msra.mxu0 %v174
    %241 = vmatpush.bf16.msra.mxu0 %v170
    %242 = vmatmul.bf16.gmra.mxu0 %v72
    %v243 = vpop.f32.mrf.mxu0
    %v244 = vadd.f32 %v60, %v243
    %v245 = vpop.f32.mrf.mxu0
    %v246 = vadd.f32 %v60, %v245
    %247 = vdwg.mxu0
    %248 = vmatpush.bf16.msra.mxu0 %v199
    %249 = vmatpush.bf16.msra.mxu0 %v195
    %250 = vmatpush.bf16.msra.mxu0 %v191
    %251 = vmatpush.bf16.msra.mxu0 %v187
    %252 = vmatpush.bf16.msra.mxu0 %v183
    %253 = vmatpush.bf16.msra.mxu0 %v179
    %254 = vmatpush.bf16.msra.mxu0 %v175
    %255 = vmatpush.bf16.msra.mxu0 %v171
    %256 = vmatmul.bf16.gmra.mxu0 %v72
    %v257 = vpop.f32.mrf.mxu0
    %v258 = vadd.f32 %v61, %v257
    %v259 = vpop.f32.mrf.mxu0
    %v260 = vadd.f32 %v61, %v259
    %261 = vdwg.mxu0
    %262 = vmatpush.bf16.msra.mxu0 %v200
    %263 = vmatpush.bf16.msra.mxu0 %v196
    %264 = vmatpush.bf16.msra.mxu0 %v192
    %265 = vmatpush.bf16.msra.mxu0 %v188
    %266 = vmatpush.bf16.msra.mxu0 %v184
    %267 = vmatpush.bf16.msra.mxu0 %v180
    %268 = vmatpush.bf16.msra.mxu0 %v176
    %269 = vmatpush.bf16.msra.mxu0 %v172
    %270 = vmatmul.bf16.gmra.mxu0 %v72
    %v271 = vpop.f32.mrf.mxu0
    %v272 = vadd.f32 %v62, %v271
    %v273 = vpop.f32.mrf.mxu0
    %v274 = vadd.f32 %v62, %v273
    %275 = vdwg.mxu0
    %276 = vmatpush.bf16.msra.mxu0 %v201
    %277 = vmatpush.bf16.msra.mxu0 %v197
    %278 = vmatpush.bf16.msra.mxu0 %v193
    %279 = vmatpush.bf16.msra.mxu0 %v189
    %280 = vmatpush.bf16.msra.mxu0 %v185
    %281 = vmatpush.bf16.msra.mxu0 %v181
    %282 = vmatpush.bf16.msra.mxu0 %v177
    %283 = vmatpush.bf16.msra.mxu0 %v173
    %284 = vmatmul.bf16.gmra.mxu0 %v72
    %v285 = vpop.f32.mrf.mxu0
    %v286 = vadd.f32 %v63, %v285
    %v287 = vpop.f32.mrf.mxu0
    %v288 = vadd.f32 %v63, %v287
    %289 = vdwg.mxu0
    %v290 = vld [vmem:[#allocation2] sm:$0xff]
    %v291 = vld [vmem:[#allocation2 + $0x8] sm:$0xff]
    %v292 = vmax.f32 %v244, %v272
    %v293 = vmax.f32 %v258, %v286
    %v294 = vmax.f32 %v292, %v293
    %295 = vmax.xlane.f32.xlu0 %v294
    %v296 = vpop.xlane.xlu0 %295
    %v297 = vmax.f32 %v246, %v274
    %v298 = vmax.f32 %v260, %v288
    %v299 = vmax.f32 %v297, %v298
    %300 = vmax.xlane.f32.xlu0 %v299
    %v301 = vpop.xlane.xlu0 %300
    %v302 = vmax.f32 %v290, %v296
    %v303 = vmax.f32 %v291, %v301
    %v304 = vld [vmem:[#allocation3] sm:$0xff]
    %v305 = vld [vmem:[#allocation3 + $0x8] sm:$0xff]
    %v306 = vsub.f32 %v290, %v302
    %v307 = vsub.f32 %v291, %v303
    %v308 = vmul.f32 %v306, 1.442695
    %v309 = vpow.pop %v308
    %v310 = vmul.f32 %v307, 1.442695
    %v311 = vpow.pop %v310
    %v312 = vmul.f32 %v304, %v309
    %v313 = vmul.f32 %v305, %v311
    %315 = vset.pattern.permute.xlu0 0
    %316 = vperm.xlu0 %315, %v302
    %v317 = vpop.permute.xlu0 %316
    %320 = vset.pattern.permute.xlu0 0
    %321 = vperm.xlu0 %320, %v303
    %v322 = vpop.permute.xlu0 %321
    %v324 = vsub.f32 %v244, %v317
    %v325 = vsub.f32 %v258, %v317
    %v326 = vsub.f32 %v272, %v317
    %v327 = vsub.f32 %v286, %v317
    %v328 = vsub.f32 %v246, %v322
    %v329 = vsub.f32 %v260, %v322
    %v330 = vsub.f32 %v274, %v322
    %v331 = vsub.f32 %v288, %v322
    %v332 = vmul.f32 %v324, 1.442695
    %v333 = vpow.pop %v332
    %v334 = vmul.f32 %v325, 1.442695
    %v335 = vpow.pop %v334
    %v336 = vmul.f32 %v326, 1.442695
    %v337 = vpow.pop %v336
    %v338 = vmul.f32 %v327, 1.442695
    %v339 = vpow.pop %v338
    %v340 = vmul.f32 %v328, 1.442695
    %v341 = vpow.pop %v340
    %v342 = vmul.f32 %v329, 1.442695
    %v343 = vpow.pop %v342
    %v344 = vmul.f32 %v330, 1.442695
    %v345 = vpow.pop %v344
    %v346 = vmul.f32 %v331, 1.442695
    %v347 = vpow.pop %v346
    %v348 = vadd.f32 %v333, %v335
    %v349 = vadd.f32 %v348, %v337
    %v350 = vadd.f32 %v349, %v339
    %351 = vadd.xlane.f32.xlu0 %v350
    %v352 = vpop.xlane.xlu0 %351
    %v353 = vadd.f32 %v341, %v343
    %v354 = vadd.f32 %v353, %v345
    %v355 = vadd.f32 %v354, %v347
    %356 = vadd.xlane.f32.xlu0 %v355
    %v357 = vpop.xlane.xlu0 %356
    %v358 = vadd.f32 %v312, %v352
    %v359 = vadd.f32 %v313, %v357
    %vm360 = vcmask 7168
    %361 = vst.msk [vmem:[#allocation3] sm:$0xff] %vm360, %v358
    %362 = vst.msk [vmem:[#allocation3 + $0x8] sm:$0xff] %vm360, %v359
    %363 = vst.msk [vmem:[#allocation2] sm:$0xff] %vm360, %v302
    %364 = vst.msk [vmem:[#allocation2 + $0x8] sm:$0xff] %vm360, %v303
    %s365 = smul.u32 0, 512
    %s366 = sshra.s32 %s365, 7
    %s367 = sand.u32 %s365, 127
    %s368 = smul.addr %s366, 8
    %s369 = scalar_lea.vmem [#allocation4], %s368
    %370 = vst [vmem:[%s369] sm:$0xff] %v244
    %371 = vst [vmem:[%s369 + $0x8] sm:$0xff] %v258
    %372 = vst [vmem:[%s369 + $0x10] sm:$0xff] %v272
    %373 = vst [vmem:[%s369 + $0x18] sm:$0xff] %v286
    %374 = vst [vmem:[%s369 + $0x20] sm:$0xff] %v246
    %375 = vst [vmem:[%s369 + $0x28] sm:$0xff] %v260
    %376 = vst [vmem:[%s369 + $0x30] sm:$0xff] %v274
    %377 = vst [vmem:[%s369 + $0x38] sm:$0xff] %v288
    // Predicated region
    $region18: #{decoder_head.1} parent=1 // pred_check
      %p378 = pneg %p15
    $region19: #{decoder_head.1} parent=1 // pred_check_branch
      %380 = sbr.rel (%p378) target = $region21
    $region20: #{decoder_head.1} parent=1 // pred_region
      %v381 = vld [vmem:[#allocation2] sm:$0xff]
      %v382 = vld [vmem:[#allocation2 + $0x8] sm:$0xff]
      %v383 = vld [vmem:[#allocation3] sm:$0xff]
      %v384 = vld [vmem:[#allocation3 + $0x8] sm:$0xff]
      %v385 = vlog2.pop %v383
      %v386 = vmul.f32 %v385, 0.6931472
      %v387 = vlog2.pop %v384
      %v388 = vmul.f32 %v387, 0.6931472
      %v389 = vadd.f32 %v381, %v386
      %v390 = vadd.f32 %v382, %v388
      %v391 = vld [vmem:[#allocation4] sm:$0xff]
      %v392 = vld [vmem:[#allocation4 + $0x8] sm:$0xff]
      %v393 = vld [vmem:[#allocation4 + $0x10] sm:$0xff]
      %v394 = vld [vmem:[#allocation4 + $0x18] sm:$0xff]
      %v395 = vld [vmem:[#allocation4 + $0x20] sm:$0xff]
      %v396 = vld [vmem:[#allocation4 + $0x28] sm:$0xff]
      %v397 = vld [vmem:[#allocation4 + $0x30] sm:$0xff]
      %v398 = vld [vmem:[#allocation4 + $0x38] sm:$0xff]
      %400 = vset.pattern.permute.xlu0 0
      %401 = vperm.xlu0 %400, %v389
      %v402 = vpop.permute.xlu0 %401
      %405 = vset.pattern.permute.xlu0 0
      %406 = vperm.xlu0 %405, %v390
      %v407 = vpop.permute.xlu0 %406
      %v409 = vsub.f32 %v391, %v402
      %v410 = vsub.f32 %v392, %v402
      %v411 = vsub.f32 %v393, %v402
      %v412 = vsub.f32 %v394, %v402
      %v413 = vsub.f32 %v395, %v407
      %v414 = vsub.f32 %v396, %v407
      %v415 = vsub.f32 %v397, %v407
      %v416 = vsub.f32 %v398, %v407
      %417 = vst [vmem:[#allocation4] sm:$0xff] %v409
      %418 = vst [vmem:[#allocation4 + $0x8] sm:$0xff] %v410
      %419 = vst [vmem:[#allocation4 + $0x10] sm:$0xff] %v411
      %420 = vst [vmem:[#allocation4 + $0x18] sm:$0xff] %v412
      %421 = vst [vmem:[#allocation4 + $0x20] sm:$0xff] %v413
      %422 = vst [vmem:[#allocation4 + $0x28] sm:$0xff] %v414
      %423 = vst [vmem:[#allocation4 + $0x30] sm:$0xff] %v415
      %424 = vst [vmem:[#allocation4 + $0x38] sm:$0xff] %v416
    $region21: #{decoder_head.1} parent=1 // pred_fallthru
      _
    // Predicated region
    $region22: #{decoder_head.1} parent=1 // pred_check
      _
    $region23: #{decoder_head.1} parent=1 // pred_check_branch
      %426 = sbr.rel (0) target = $region25
    $region24: #{decoder_head.1} parent=1 // pred_region
      %428 = vsyncadd [#allocation5], 0
      %s429 = sshll.u32 [#allocation4], 4
      %s430 = int_to_ptr.vmem [resolvable:$true] %s429
      %s431 = sshll.u32 %s3, 4
      %s432 = int_to_ptr.hbm [resolvable:$true] %s431
      %437 = dma.vmem_to_hbm [thread:$0]  %s430, 1024, %s432, [#allocation5], 512, 512, 32
    $region25: #{decoder_head.1} parent=1 // pred_fallthru
      _
    // Predicated region
    $region26: #{decoder_head.1} parent=1 // pred_check
      _
    $region27: #{decoder_head.1} parent=1 // pred_check_branch
      %439 = sbr.rel (0) target = $region29
    $region28: #{decoder_head.1} parent=1 // pred_region
      %441 = dma.done [#allocation5], 1024
    $region29: #{decoder_head.1} parent=1 // pred_fallthru
      _
    %442 = vsyncpa [#allocation5], 1

</llo_original>
